<compile_context>
chip_gen: v5e
topology: v5e:2x2
jax: 0.10.0
libtpu: 0.0.40
codegen_flags: <defaults>
</compile_context>

<pallas_src>
import jax
import jax.numpy as jnp
from jax.experimental import pallas as pl
from jax.experimental.pallas import tpu as pltpu

# ---- small, deterministic config (mirrors PCNet defaults at reduced size) ----
B = 2              # batch
W = 8              # window_size (seq)
N = 16             # points per frame
TRACK_FEAT = 8     # track_feat_dim
PC_FEAT = 4        # pcs last dim; forward consumes pcs[..., :-1] -> 3 features
PC_IN = PC_FEAT - 1
PC_IN_PAD = 8      # pad K=3 -> 8 so the first matmul is not a 3-row MXU pass
PC_HIDDEN = 32     # hidden width of the per-point MLP
PC_OUT = 32        # pc_out == encoder_out_size (scaled down from 256)
DEC_OUT = 16       # dec_out_size

HEAD_LANES = 8     # packed head outputs: center(3) | size(3) | rot(1) | gt(1)
ROT_LANE = 6
GT_LANE = 7

F32 = jnp.float32


# --------------------------- fused Pallas kernel ------------------------------
def pcnet_fused_kernel(pts_ref, trk_ref, pe_ref,
                       pw1_ref, pb1_ref, pw2_ref, pb2_ref,
                       hw1_ref, hb1_ref, hw2_ref, hb2_ref,
                       out_ref):
    """Whole PCNet forward: point MLP + max-pool, mask, PE, temporal pool, heads."""
    # --- PC encoder hot path ---------------------------------------------------
    # TODO(synk): PCEncoder source not provided; PointNet-style shared MLP + max-pool.
    pts = pts_ref[...]                                                  # (B*W*N, PC_IN_PAD)
    h = jnp.maximum(
        jnp.dot(pts, pw1_ref[...], preferred_element_type=jnp.float32) + pb1_ref[...], 0.0)
    h = jnp.dot(h, pw2_ref[...], preferred_element_type=jnp.float32) + pb2_ref[...]
    feats = jnp.max(h.reshape(B * W, N, PC_OUT), axis=1)                # (B*W, PC_OUT)

    # --- padding mask + positional encoding + temporal pooling ------------------
    # padding_mask = (tracks.sum(-1) == 0); valid = 1 - padding_mask
    valid = (jnp.sum(trk_ref[...], axis=-1, keepdims=True) != 0).astype(jnp.float32)  # (B*W, 1)
    x = feats * valid
    # TODO(synk): SinusoidalPositionalEncoding source not provided; standard PE + mask.
    x = (x + pe_ref[...]) * valid
    # TODO(synk): PoolTempEnc source not provided; residual masked max over the window.
    xb = x.reshape(B, W, PC_OUT)
    vb = valid.reshape(B, W, 1)
    pooled = jnp.max(jnp.where(vb > 0.0, xb, jnp.float32(-1e30)),
                     axis=1, keepdims=True)                             # (B, 1, PC_OUT)
    x = ((xb + pooled) * vb).reshape(B * W, PC_OUT)                     # (B*W, PC_OUT)

    # --- DecoderHeads (exact semantics of the provided module), heads fused -----
    # torch.max(x, 1)[0] over the window for the size head
    x_pooled = jnp.max(x.reshape(B, W, PC_OUT), axis=1)                 # (B, PC_OUT)

    def heads(v):
        hh = jnp.maximum(
            jnp.dot(v, hw1_ref[...], preferred_element_type=jnp.float32) + hb1_ref[...], 0.0)
        return jnp.dot(hh, hw2_ref[...], preferred_element_type=jnp.float32) + hb2_ref[...]

    frame_out = heads(x)           # (B*W, 8) lanes: center(0:3) size(3:6) rot(6) gt(7)
    pool_out = heads(x_pooled)     # (B, 8)   only size lanes (3:6) are used downstream

    # sigmoid on the gt/score lane only (EUP exp + approx reciprocal)
    lane = jax.lax.broadcasted_iota(jnp.int32, frame_out.shape, 1)
    sig = pl.reciprocal(1.0 + jnp.exp(-frame_out), approx=True)
    frame_out = jnp.where(lane == GT_LANE, sig, frame_out)

    out_ref[0:B * W, :] = frame_out
    out_ref[B * W:B * W + B, :] = pool_out


# --------------------------- parameters / glue --------------------------------
def _init_linear(key, fan_in, fan_out):
    kw, kb = jax.random.split(key)
    w = jax.random.normal(kw, (fan_in, fan_out), F32) * (1.0 / jnp.sqrt(fan_in))
    b = jax.random.normal(kb, (1, fan_out), F32) * 0.01
    return w, b


def init_params(seed=42):
    keys = jax.random.split(jax.random.PRNGKey(seed), 10)
    p = {}
    p["pc_w1"], p["pc_b1"] = _init_linear(keys[0], PC_IN, PC_HIDDEN)
    p["pc_w2"], p["pc_b2"] = _init_linear(keys[1], PC_HIDDEN, PC_OUT)
    p["c_w1"], p["c_b1"] = _init_linear(keys[2], PC_OUT, DEC_OUT)   # fc_center
    p["c_w2"], p["c_b2"] = _init_linear(keys[3], DEC_OUT, 3)
    p["s_w1"], p["s_b1"] = _init_linear(keys[4], PC_OUT, DEC_OUT)   # fc_size
    p["s_w2"], p["s_b2"] = _init_linear(keys[5], DEC_OUT, 3)
    p["r_w1"], p["r_b1"] = _init_linear(keys[6], PC_OUT, DEC_OUT)   # fc_rotation
    p["r_w2"], p["r_b2"] = _init_linear(keys[7], DEC_OUT, 1)
    p["g_w1"], p["g_b1"] = _init_linear(keys[8], PC_OUT, DEC_OUT)   # fc_gt
    p["g_w2"], p["g_b2"] = _init_linear(keys[9], DEC_OUT, 1)
    return p


def sinusoidal_pe(length, d_model):
    pos = jnp.arange(length, dtype=F32)[:, None]
    i = jnp.arange(0, d_model, 2, dtype=F32)
    div = jnp.exp(-jnp.log(10000.0) * i / d_model)
    ang = pos * div[None, :]
    pe = jnp.zeros((length, d_model), F32)
    pe = pe.at[:, 0::2].set(jnp.sin(ang))
    pe = pe.at[:, 1::2].set(jnp.cos(ang))
    return pe


def pcnet_forward(tracks, pcs, params):
    assert pcs.shape == (B, W, N, PC_FEAT)
    assert tracks.shape == (B, W, TRACK_FEAT)

    # points: drop last channel, flatten, zero-pad K=3 -> 8 (matching padded weight)
    pts = pcs[..., :PC_IN].reshape(B * W * N, PC_IN).astype(F32)
    pts = jnp.pad(pts, ((0, 0), (0, PC_IN_PAD - PC_IN)))
    pw1 = jnp.pad(params["pc_w1"], ((0, PC_IN_PAD - PC_IN), (0, 0)))

    tracks2d = tracks.reshape(B * W, TRACK_FEAT).astype(F32)
    pe = jnp.tile(sinusoidal_pe(W, PC_OUT), (B, 1))                     # (B*W, PC_OUT)

    # fuse decoder-head layer 1: (PC_OUT, 4*DEC_OUT)
    hw1 = jnp.concatenate(
        [params["c_w1"], params["s_w1"], params["r_w1"], params["g_w1"]], axis=1)
    hb1 = jnp.concatenate(
        [params["c_b1"], params["s_b1"], params["r_b1"], params["g_b1"]], axis=1)
    # fuse decoder-head layer 2 block-diagonally: (4*DEC_OUT, 8)
    hw2 = jnp.zeros((4 * DEC_OUT, HEAD_LANES), F32)
    hw2 = hw2.at[0 * DEC_OUT:1 * DEC_OUT, 0:3].set(params["c_w2"])
    hw2 = hw2.at[1 * DEC_OUT:2 * DEC_OUT, 3:6].set(params["s_w2"])
    hw2 = hw2.at[2 * DEC_OUT:3 * DEC_OUT, ROT_LANE:ROT_LANE + 1].set(params["r_w2"])
    hw2 = hw2.at[3 * DEC_OUT:4 * DEC_OUT, GT_LANE:GT_LANE + 1].set(params["g_w2"])
    hb2 = jnp.concatenate(
        [params["c_b2"], params["s_b2"], params["r_b2"], params["g_b2"]], axis=1)

    vmem = pltpu.MemorySpace.VMEM
    out = pl.pallas_call(
        pcnet_fused_kernel,
        in_specs=[pl.BlockSpec(memory_space=vmem)] * 11,
        out_specs=pl.BlockSpec(memory_space=vmem),
        out_shape=jax.ShapeDtypeStruct((B * W + B, HEAD_LANES), F32),
    )(pts, tracks2d, pe,
      pw1, params["pc_b1"], params["pc_w2"], params["pc_b2"],
      hw1, hb1, hw2, hb2)

    frame = out[:B * W]
    center = frame[:, 0:3].reshape(B, W, 3)
    rot = frame[:, ROT_LANE:ROT_LANE + 1].reshape(B, W, 1)
    score = frame[:, GT_LANE:GT_LANE + 1].reshape(B, W, 1)
    size = out[B * W:, 3:6]                                            # (B, 3)
    return center, size, rot, score


# ----------------------- pure-JAX reference (for checking) --------------------
def pcnet_reference(tracks, pcs, params):
    pts = pcs[..., :PC_IN].reshape(B * W * N, PC_IN).astype(F32)
    h = jax.nn.relu(pts @ params["pc_w1"] + params["pc_b1"])
    h = h @ params["pc_w2"] + params["pc_b2"]
    feats = jnp.max(h.reshape(B * W, N, PC_OUT), axis=1)
    trk = tracks.reshape(B * W, TRACK_FEAT).astype(F32)
    valid = (jnp.sum(trk, axis=-1, keepdims=True) != 0).astype(F32)
    pe = jnp.tile(sinusoidal_pe(W, PC_OUT), (B, 1))
    x = feats * valid
    x = (x + pe) * valid
    xb = x.reshape(B, W, PC_OUT)
    vb = valid.reshape(B, W, 1)
    pooled = jnp.max(jnp.where(vb > 0, xb, -1e30), axis=1, keepdims=True)
    x = (xb + pooled) * vb                                             # (B, W, F)

    def head(v, a, ab, c, cb):
        return jax.nn.relu(v @ a + ab) @ c + cb

    center = head(x, params["c_w1"], params["c_b1"], params["c_w2"], params["c_b2"])
    rot = head(x, params["r_w1"], params["r_b1"], params["r_w2"], params["r_b2"])
    score = jax.nn.sigmoid(head(x, params["g_w1"], params["g_b1"],
                                params["g_w2"], params["g_b2"]))
    x_pooled = jnp.max(x, axis=1)
    size = head(x_pooled, params["s_w1"], params["s_b1"], params["s_w2"], params["s_b2"])
    return center, size, rot, score


if __name__ == "__main__":
    key = jax.random.PRNGKey(0)
    k_tracks, k_pcs = jax.random.split(key)
    tracks = jax.random.normal(k_tracks, (B, W, TRACK_FEAT), F32)
    pcs = jax.random.normal(k_pcs, (B, W, N, PC_FEAT), F32)
    # zero out the last two frames of each track so padding_mask is exercised
    tracks = tracks.at[:, W - 2:, :].set(0.0)

    params = init_params(42)
    center, size, rot, score = pcnet_forward(tracks, pcs, params)
    jax.block_until_ready((center, size, rot, score))

    assert center.shape == (B, W, 3)
    assert size.shape == (B, 3)
    assert rot.shape == (B, W, 1)
    assert score.shape == (B, W, 1)

    c_ref, s_ref, r_ref, sc_ref = pcnet_reference(tracks, pcs, params)
    for got, ref in ((center, c_ref), (size, s_ref), (rot, r_ref), (score, sc_ref)):
        assert jnp.allclose(got, ref, atol=2e-2, rtol=2e-2), "mismatch vs reference"

    print("KERNEL_OK")
</pallas_src>

<mosaic_0001>
module attributes {stable_mosaic.version = 11 : i64} {
  func.func @pcnet_fused_kernel(%arg0: memref<256x8xf32, #tpu.memory_space<vmem>>, %arg1: memref<16x8xf32, #tpu.memory_space<vmem>>, %arg2: memref<16x32xf32, #tpu.memory_space<vmem>>, %arg3: memref<8x32xf32, #tpu.memory_space<vmem>>, %arg4: memref<1x32xf32, #tpu.memory_space<vmem>>, %arg5: memref<32x32xf32, #tpu.memory_space<vmem>>, %arg6: memref<1x32xf32, #tpu.memory_space<vmem>>, %arg7: memref<32x64xf32, #tpu.memory_space<vmem>>, %arg8: memref<1x64xf32, #tpu.memory_space<vmem>>, %arg9: memref<64x8xf32, #tpu.memory_space<vmem>>, %arg10: memref<1x8xf32, #tpu.memory_space<vmem>>, %arg11: memref<18x8xf32, #tpu.memory_space<vmem>>) attributes {dimension_semantics = [], scalar_prefetch = 0 : i64, scratch_operands = 0 : i64, tpu.core_type = #tpu.core_type<tc>} {
    %c0 = arith.constant 0 : index
    %c0_0 = arith.constant 0 : index
    %0 = vector.load %arg0[%c0, %c0_0] : memref<256x8xf32, #tpu.memory_space<vmem>>, vector<256x8xf32>
    %c0_1 = arith.constant 0 : index
    %c0_2 = arith.constant 0 : index
    %1 = vector.load %arg3[%c0_1, %c0_2] : memref<8x32xf32, #tpu.memory_space<vmem>>, vector<8x32xf32>
    %cst = arith.constant dense<0.000000e+00> : vector<256x32xf32>
    %2 = tpu.matmul %0, %1, %cst {dimension_numbers = #tpu.dot_dimension_numbers<[1], [0], [0], [1], [0, 0, 1, 1], [], []>} : vector<256x8xf32>, vector<8x32xf32>, vector<256x32xf32> -> vector<256x32xf32>
    %c0_3 = arith.constant 0 : index
    %c0_4 = arith.constant 0 : index
    %3 = vector.load %arg4[%c0_3, %c0_4] : memref<1x32xf32, #tpu.memory_space<vmem>>, vector<1x32xf32>
    %4 = vector.broadcast %3 : vector<1x32xf32> to vector<256x32xf32>
    %5 = arith.addf %2, %4 : vector<256x32xf32>
    %cst_5 = arith.constant 0.000000e+00 : f32
    %6 = vector.broadcast %cst_5 : f32 to vector<256x32xf32>
    %7 = arith.maximumf %5, %6 : vector<256x32xf32>
    %c0_6 = arith.constant 0 : index
    %c0_7 = arith.constant 0 : index
    %8 = vector.load %arg5[%c0_6, %c0_7] : memref<32x32xf32, #tpu.memory_space<vmem>>, vector<32x32xf32>
    %cst_8 = arith.constant dense<0.000000e+00> : vector<256x32xf32>
    %9 = tpu.matmul %7, %8, %cst_8 {dimension_numbers = #tpu.dot_dimension_numbers<[1], [0], [0], [1], [0, 0, 1, 1], [], []>} : vector<256x32xf32>, vector<32x32xf32>, vector<256x32xf32> -> vector<256x32xf32>
    %c0_9 = arith.constant 0 : index
    %c0_10 = arith.constant 0 : index
    %10 = vector.load %arg6[%c0_9, %c0_10] : memref<1x32xf32, #tpu.memory_space<vmem>>, vector<1x32xf32>
    %11 = vector.broadcast %10 : vector<1x32xf32> to vector<256x32xf32>
    %12 = arith.addf %9, %11 : vector<256x32xf32>
    %13 = vector.shape_cast %12 : vector<256x32xf32> to vector<16x16x32xf32>
    %cst_11 = arith.constant dense<0xFF800000> : vector<16x32xf32>
    %14 = vector.multi_reduction <maximumf>, %13, %cst_11 [1] : vector<16x16x32xf32> to vector<16x32xf32>
    %c0_12 = arith.constant 0 : index
    %c0_13 = arith.constant 0 : index
    %15 = vector.load %arg1[%c0_12, %c0_13] : memref<16x8xf32, #tpu.memory_space<vmem>>, vector<16x8xf32>
    %cst_14 = arith.constant dense<0.000000e+00> : vector<16xf32>
    %16 = vector.multi_reduction <add>, %15, %cst_14 [1] : vector<16x8xf32> to vector<16xf32>
    %17 = vector.shape_cast %16 : vector<16xf32> to vector<16x1xf32>
    %cst_15 = arith.constant 0.000000e+00 : f32
    %18 = vector.broadcast %cst_15 : f32 to vector<16x1xf32>
    %19 = arith.cmpf one, %17, %18 : vector<16x1xf32>
    %20 = arith.extui %19 : vector<16x1xi1> to vector<16x1xi32>
    %21 = arith.sitofp %20 : vector<16x1xi32> to vector<16x1xf32>
    %22 = vector.broadcast %21 : vector<16x1xf32> to vector<16x32xf32>
    %23 = arith.mulf %14, %22 : vector<16x32xf32>
    %c0_16 = arith.constant 0 : index
    %c0_17 = arith.constant 0 : index
    %24 = vector.load %arg2[%c0_16, %c0_17] : memref<16x32xf32, #tpu.memory_space<vmem>>, vector<16x32xf32>
    %25 = arith.addf %23, %24 : vector<16x32xf32>
    %26 = vector.broadcast %21 : vector<16x1xf32> to vector<16x32xf32>
    %27 = arith.mulf %25, %26 : vector<16x32xf32>
    %28 = vector.shape_cast %27 : vector<16x32xf32> to vector<2x8x32xf32>
    %29 = vector.shape_cast %21 : vector<16x1xf32> to vector<2x8x1xf32>
    %cst_18 = arith.constant 0.000000e+00 : f32
    %30 = vector.broadcast %cst_18 : f32 to vector<2x8x1xf32>
    %31 = arith.cmpf ogt, %29, %30 : vector<2x8x1xf32>
    %cst_19 = arith.constant -1.000000e+30 : f32
    %32 = vector.shape_cast %31 : vector<2x8x1xi1> to vector<2x8x1xi1>
    %33 = vector.broadcast %32 : vector<2x8x1xi1> to vector<2x8x32xi1>
    %34 = vector.broadcast %cst_19 : f32 to vector<2x8x32xf32>
    %35 = arith.select %33, %28, %34 : vector<2x8x32xi1>, vector<2x8x32xf32>
    %cst_20 = arith.constant dense<0xFF800000> : vector<2x32xf32>
    %36 = vector.multi_reduction <maximumf>, %35, %cst_20 [1] : vector<2x8x32xf32> to vector<2x32xf32>
    %37 = vector.shape_cast %36 : vector<2x32xf32> to vector<2x1x32xf32>
    %38 = vector.broadcast %37 : vector<2x1x32xf32> to vector<2x8x32xf32>
    %39 = arith.addf %28, %38 : vector<2x8x32xf32>
    %40 = vector.broadcast %29 : vector<2x8x1xf32> to vector<2x8x32xf32>
    %41 = arith.mulf %39, %40 : vector<2x8x32xf32>
    %42 = vector.shape_cast %41 : vector<2x8x32xf32> to vector<16x32xf32>
    %43 = vector.shape_cast %42 : vector<16x32xf32> to vector<2x8x32xf32>
    %cst_21 = arith.constant dense<0xFF800000> : vector<2x32xf32>
    %44 = vector.multi_reduction <maximumf>, %43, %cst_21 [1] : vector<2x8x32xf32> to vector<2x32xf32>
    %c0_22 = arith.constant 0 : index
    %c0_23 = arith.constant 0 : index
    %45 = vector.load %arg7[%c0_22, %c0_23] : memref<32x64xf32, #tpu.memory_space<vmem>>, vector<32x64xf32>
    %cst_24 = arith.constant dense<0.000000e+00> : vector<16x64xf32>
    %46 = tpu.matmul %42, %45, %cst_24 {dimension_numbers = #tpu.dot_dimension_numbers<[1], [0], [0], [1], [0, 0, 1, 1], [], []>} : vector<16x32xf32>, vector<32x64xf32>, vector<16x64xf32> -> vector<16x64xf32>
    %c0_25 = arith.constant 0 : index
    %c0_26 = arith.constant 0 : index
    %47 = vector.load %arg8[%c0_25, %c0_26] : memref<1x64xf32, #tpu.memory_space<vmem>>, vector<1x64xf32>
    %48 = vector.broadcast %47 : vector<1x64xf32> to vector<16x64xf32>
    %49 = arith.addf %46, %48 : vector<16x64xf32>
    %cst_27 = arith.constant 0.000000e+00 : f32
    %50 = vector.broadcast %cst_27 : f32 to vector<16x64xf32>
    %51 = arith.maximumf %49, %50 : vector<16x64xf32>
    %c0_28 = arith.constant 0 : index
    %c0_29 = arith.constant 0 : index
    %52 = vector.load %arg9[%c0_28, %c0_29] : memref<64x8xf32, #tpu.memory_space<vmem>>, vector<64x8xf32>
    %cst_30 = arith.constant dense<0.000000e+00> : vector<16x8xf32>
    %53 = tpu.matmul %51, %52, %cst_30 {dimension_numbers = #tpu.dot_dimension_numbers<[1], [0], [0], [1], [0, 0, 1, 1], [], []>} : vector<16x64xf32>, vector<64x8xf32>, vector<16x8xf32> -> vector<16x8xf32>
    %c0_31 = arith.constant 0 : index
    %c0_32 = arith.constant 0 : index
    %54 = vector.load %arg10[%c0_31, %c0_32] : memref<1x8xf32, #tpu.memory_space<vmem>>, vector<1x8xf32>
    %55 = vector.broadcast %54 : vector<1x8xf32> to vector<16x8xf32>
    %56 = arith.addf %53, %55 : vector<16x8xf32>
    %c0_33 = arith.constant 0 : index
    %c0_34 = arith.constant 0 : index
    %57 = vector.load %arg7[%c0_33, %c0_34] : memref<32x64xf32, #tpu.memory_space<vmem>>, vector<32x64xf32>
    %cst_35 = arith.constant dense<0.000000e+00> : vector<2x64xf32>
    %58 = tpu.matmul %44, %57, %cst_35 {dimension_numbers = #tpu.dot_dimension_numbers<[1], [0], [0], [1], [0, 0, 1, 1], [], []>} : vector<2x32xf32>, vector<32x64xf32>, vector<2x64xf32> -> vector<2x64xf32>
    %c0_36 = arith.constant 0 : index
    %c0_37 = arith.constant 0 : index
    %59 = vector.load %arg8[%c0_36, %c0_37] : memref<1x64xf32, #tpu.memory_space<vmem>>, vector<1x64xf32>
    %60 = vector.broadcast %59 : vector<1x64xf32> to vector<2x64xf32>
    %61 = arith.addf %58, %60 : vector<2x64xf32>
    %cst_38 = arith.constant 0.000000e+00 : f32
    %62 = vector.broadcast %cst_38 : f32 to vector<2x64xf32>
    %63 = arith.maximumf %61, %62 : vector<2x64xf32>
    %c0_39 = arith.constant 0 : index
    %c0_40 = arith.constant 0 : index
    %64 = vector.load %arg9[%c0_39, %c0_40] : memref<64x8xf32, #tpu.memory_space<vmem>>, vector<64x8xf32>
    %cst_41 = arith.constant dense<0.000000e+00> : vector<2x8xf32>
    %65 = tpu.matmul %63, %64, %cst_41 {dimension_numbers = #tpu.dot_dimension_numbers<[1], [0], [0], [1], [0, 0, 1, 1], [], []>} : vector<2x64xf32>, vector<64x8xf32>, vector<2x8xf32> -> vector<2x8xf32>
    %c0_42 = arith.constant 0 : index
    %c0_43 = arith.constant 0 : index
    %66 = vector.load %arg10[%c0_42, %c0_43] : memref<1x8xf32, #tpu.memory_space<vmem>>, vector<1x8xf32>
    %67 = vector.broadcast %66 : vector<1x8xf32> to vector<2x8xf32>
    %68 = arith.addf %65, %67 : vector<2x8xf32>
    %69 = tpu.iota {dimensions = array<i32: 1>} : vector<16x8xi32>
    %cst_44 = arith.constant 0.000000e+00 : f32
    %70 = vector.broadcast %cst_44 : f32 to vector<16x8xf32>
    %71 = arith.subf %70, %56 : vector<16x8xf32>
    %72 = math.exp %71 : vector<16x8xf32>
    %cst_45 = arith.constant 1.000000e+00 : f32
    %73 = vector.broadcast %cst_45 : f32 to vector<16x8xf32>
    %74 = arith.addf %73, %72 : vector<16x8xf32>
    %75 = tpu.reciprocal %74 {approx = true} : vector<16x8xf32> -> vector<16x8xf32>
    %c7_i32 = arith.constant 7 : i32
    %76 = vector.broadcast %c7_i32 : i32 to vector<16x8xi32>
    %77 = arith.cmpi eq, %69, %76 : vector<16x8xi32>
    %78 = arith.select %77, %75, %56 : vector<16x8xi1>, vector<16x8xf32>
    %c0_46 = arith.constant 0 : index
    %c0_47 = arith.constant 0 : index
    %79 = vector.load %arg11[%c0_46, %c0_47] : memref<18x8xf32, #tpu.memory_space<vmem>>, vector<16x8xf32>
    tpu.vector_store %arg11[%c0_46, %c0_47], %78 {strides = array<i32>} : memref<18x8xf32, #tpu.memory_space<vmem>>, vector<16x8xf32>,
    %c16 = arith.constant 16 : index
    %c0_48 = arith.constant 0 : index
    %80 = vector.load %arg11[%c16, %c0_48] : memref<18x8xf32, #tpu.memory_space<vmem>>, vector<2x8xf32>
    tpu.vector_store %arg11[%c16, %c0_48], %68 {strides = array<i32>} : memref<18x8xf32, #tpu.memory_space<vmem>>, vector<2x8xf32>,
    return
  }
}

</mosaic_0001>

<llo_original>
// kernel: tpu_custom_call.1
$region0: #{tpu_custom_call.1}
  #allocation0 [shape = 'u32[]', space=smem, size = 0x4, offset = 0x4, fixed_abs, tag = 'smem constant byte address 0x4 - core index']
  #allocation1 [shape = 'u32[72,128]{1,0:T(1,128)}', space=vmem, size = 0x9000, scoped, tag = 'internal scratch']
  %s0 = inlined_call_operand.vmem [shape: f32[256,8], index: 0, kind: input, shape index: {}]
  %s1 = inlined_call_operand.vmem [shape: f32[16,8], index: 1, kind: input, shape index: {}]
  %s2 = inlined_call_operand.vmem [shape: f32[16,32], index: 2, kind: input, shape index: {}]
  %s3 = inlined_call_operand.vmem [shape: f32[8,32], index: 3, kind: input, shape index: {}]
  %s4 = inlined_call_operand.vmem [shape: f32[1,32], index: 4, kind: input, shape index: {}]
  %s5 = inlined_call_operand.vmem [shape: f32[32,32], index: 5, kind: input, shape index: {}]
  %s6 = inlined_call_operand.vmem [shape: f32[1,32], index: 6, kind: input, shape index: {}]
  %s7 = inlined_call_operand.vmem [shape: f32[32,64], index: 7, kind: input, shape index: {}]
  %s8 = inlined_call_operand.vmem [shape: f32[1,64], index: 8, kind: input, shape index: {}]
  %s9 = inlined_call_operand.vmem [shape: f32[64,8], index: 9, kind: input, shape index: {}]
  %s10 = inlined_call_operand.vmem [shape: f32[1,8], index: 10, kind: input, shape index: {}]
  %s11 = inlined_call_operand.vmem [shape: f32[18,8], index: 11, kind: output, shape index: {}]
  %s12 = sld [smem:[#allocation0]]
  $region54: #{tpu_custom_call.1} parent=0
    _
  %s14 = ssub.s32 1, %s12
  %s15 = scalar_select 0, %s14, %s12
  // Predicated region
  $region2: #{tpu_custom_call.1} parent=0 // pred_check
    _
  $region3: #{tpu_custom_call.1} parent=0 // pred_check_branch
    %17 = sbr.rel (0) target = $region5
  $region4: #{tpu_custom_call.1} parent=0 // pred_region
    _
  $region5: #{tpu_custom_call.1} parent=0 // pred_fallthru
    _
  // Predicated region
  $region6: #{tpu_custom_call.1} parent=0 // pred_check
    _
  $region7: #{tpu_custom_call.1} parent=0 // pred_check_branch
    %19 = sbr.rel (0) target = $region9
  $region8: #{tpu_custom_call.1} parent=0 // pred_region
    _
  $region9: #{tpu_custom_call.1} parent=0 // pred_fallthru
    _
  // Predicated region
  $region10: #{tpu_custom_call.1} parent=0 // pred_check
    _
  $region11: #{tpu_custom_call.1} parent=0 // pred_check_branch
    %21 = sbr.rel (0) target = $region13
  $region12: #{tpu_custom_call.1} parent=0 // pred_region
    _
  $region13: #{tpu_custom_call.1} parent=0 // pred_fallthru
    _
  // Predicated region
  $region14: #{tpu_custom_call.1} parent=0 // pred_check
    _
  $region15: #{tpu_custom_call.1} parent=0 // pred_check_branch
    %23 = sbr.rel (0) target = $region17
  $region16: #{tpu_custom_call.1} parent=0 // pred_region
    _
  $region17: #{tpu_custom_call.1} parent=0 // pred_fallthru
    _
  // Predicated region
  $region18: #{tpu_custom_call.1} parent=0 // pred_check
    _
  $region19: #{tpu_custom_call.1} parent=0 // pred_check_branch
    %25 = sbr.rel (0) target = $region21
  $region20: #{tpu_custom_call.1} parent=0 // pred_region
    _
  $region21: #{tpu_custom_call.1} parent=0 // pred_fallthru
    _
  // Predicated region
  $region22: #{tpu_custom_call.1} parent=0 // pred_check
    _
  $region23: #{tpu_custom_call.1} parent=0 // pred_check_branch
    %27 = sbr.rel (0) target = $region25
  $region24: #{tpu_custom_call.1} parent=0 // pred_region
    _
  $region25: #{tpu_custom_call.1} parent=0 // pred_fallthru
    _
  // Predicated region
  $region26: #{tpu_custom_call.1} parent=0 // pred_check
    _
  $region27: #{tpu_custom_call.1} parent=0 // pred_check_branch
    %29 = sbr.rel (0) target = $region29
  $region28: #{tpu_custom_call.1} parent=0 // pred_region
    _
  $region29: #{tpu_custom_call.1} parent=0 // pred_fallthru
    _
  // Predicated region
  $region30: #{tpu_custom_call.1} parent=0 // pred_check
    _
  $region31: #{tpu_custom_call.1} parent=0 // pred_check_branch
    %31 = sbr.rel (0) target = $region33
  $region32: #{tpu_custom_call.1} parent=0 // pred_region
    _
  $region33: #{tpu_custom_call.1} parent=0 // pred_fallthru
    _
  // Predicated region
  $region34: #{tpu_custom_call.1} parent=0 // pred_check
    _
  $region35: #{tpu_custom_call.1} parent=0 // pred_check_branch
    %33 = sbr.rel (0) target = $region37
  $region36: #{tpu_custom_call.1} parent=0 // pred_region
    _
  $region37: #{tpu_custom_call.1} parent=0 // pred_fallthru
    _
  // Predicated region
  $region38: #{tpu_custom_call.1} parent=0 // pred_check
    _
  $region39: #{tpu_custom_call.1} parent=0 // pred_check_branch
    %35 = sbr.rel (0) target = $region41
  $region40: #{tpu_custom_call.1} parent=0 // pred_region
    _
  $region41: #{tpu_custom_call.1} parent=0 // pred_fallthru
    _
  // Predicated region
  $region42: #{tpu_custom_call.1} parent=0 // pred_check
    _
  $region43: #{tpu_custom_call.1} parent=0 // pred_check_branch
    %37 = sbr.rel (0) target = $region45
  $region44: #{tpu_custom_call.1} parent=0 // pred_region
    _
  $region45: #{tpu_custom_call.1} parent=0 // pred_fallthru
    _
  %v38 = vld [vmem:[%s0] sm:$0xff]
  %v39 = vld [vmem:[%s0 + $0x8] sm:$0xff]
  %v40 = vld [vmem:[%s0 + $0x10] sm:$0xff]
  %v41 = vld [vmem:[%s0 + $0x18] sm:$0xff]
  %v42 = vld [vmem:[%s0 + $0x20] sm:$0xff]
  %v43 = vld [vmem:[%s0 + $0x28] sm:$0xff]
  %v44 = vld [vmem:[%s0 + $0x30] sm:$0xff]
  %v45 = vld [vmem:[%s0 + $0x38] sm:$0xff]
  %v46 = vld [vmem:[%s0 + $0x40] sm:$0xff]
  %v47 = vld [vmem:[%s0 + $0x48] sm:$0xff]
  %v48 = vld [vmem:[%s0 + $0x50] sm:$0xff]
  %v49 = vld [vmem:[%s0 + $0x58] sm:$0xff]
  %v50 = vld [vmem:[%s0 + $0x60] sm:$0xff]
  %v51 = vld [vmem:[%s0 + $0x68] sm:$0xff]
  %v52 = vld [vmem:[%s0 + $0x70] sm:$0xff]
  %v53 = vld [vmem:[%s0 + $0x78] sm:$0xff]
  %v54 = vld [vmem:[%s0 + $0x80] sm:$0xff]
  %v55 = vld [vmem:[%s0 + $0x88] sm:$0xff]
  %v56 = vld [vmem:[%s0 + $0x90] sm:$0xff]
  %v57 = vld [vmem:[%s0 + $0x98] sm:$0xff]
  %v58 = vld [vmem:[%s0 + $0xa0] sm:$0xff]
  %v59 = vld [vmem:[%s0 + $0xa8] sm:$0xff]
  %v60 = vld [vmem:[%s0 + $0xb0] sm:$0xff]
  %v61 = vld [vmem:[%s0 + $0xb8] sm:$0xff]
  %v62 = vld [vmem:[%s0 + $0xc0] sm:$0xff]
  %v63 = vld [vmem:[%s0 + $0xc8] sm:$0xff]
  %v64 = vld [vmem:[%s0 + $0xd0] sm:$0xff]
  %v65 = vld [vmem:[%s0 + $0xd8] sm:$0xff]
  %v66 = vld [vmem:[%s0 + $0xe0] sm:$0xff]
  %v67 = vld [vmem:[%s0 + $0xe8] sm:$0xff]
  %v68 = vld [vmem:[%s0 + $0xf0] sm:$0xff]
  %v69 = vld [vmem:[%s0 + $0xf8] sm:$0xff]
  %v70 = vld [vmem:[%s3] sm:$0xff]
  %v71 = vld [vmem:[%s4] sm:$0x1]
  %v73 = vperm.slane %v71, 0
  %vm75 = vcmask 64512
  %v77 = vsel %vm75, %v38, 0
  %v80 = vsel %vm75, %v39, 0
  %v83 = vsel %vm75, %v40, 0
  %v86 = vsel %vm75, %v41, 0
  %v89 = vsel %vm75, %v42, 0
  %v92 = vsel %vm75, %v43, 0
  %v95 = vsel %vm75, %v44, 0
  %v98 = vsel %vm75, %v45, 0
  %v101 = vsel %vm75, %v46, 0
  %v104 = vsel %vm75, %v47, 0
  %v107 = vsel %vm75, %v48, 0
  %v110 = vsel %vm75, %v49, 0
  %v113 = vsel %vm75, %v50, 0
  %v116 = vsel %vm75, %v51, 0
  %v119 = vsel %vm75, %v52, 0
  %v122 = vsel %vm75, %v53, 0
  %v125 = vsel %vm75, %v54, 0
  %v128 = vsel %vm75, %v55, 0
  %v131 = vsel %vm75, %v56, 0
  %v134 = vsel %vm75, %v57, 0
  %v137 = vsel %vm75, %v58, 0
  %v140 = vsel %vm75, %v59, 0
  %v143 = vsel %vm75, %v60, 0
  %v146 = vsel %vm75, %v61, 0
  %v149 = vsel %vm75, %v62, 0
  %v152 = vsel %vm75, %v63, 0
  %v155 = vsel %vm75, %v64, 0
  %v158 = vsel %vm75, %v65, 0
  %v161 = vsel %vm75, %v66, 0
  %v164 = vsel %vm75, %v67, 0
  %v167 = vsel %vm75, %v68, 0
  %v170 = vsel %vm75, %v69, 0
  %172 = vmatpush.msra.mxu0 0.0
  %173 = vmatpush.msra.mxu0 0.0
  %174 = vmatpush.msra.mxu0 0.0
  %175 = vmatpush.msra.mxu0 0.0
  %176 = vmatpush.msra.mxu0 0.0
  %177 = vmatpush.msra.mxu0 0.0
  %178 = vmatpush.msra.mxu0 0.0
  %179 = vmatpush.msra.mxu0 0.0
  %180 = vmatpush.msra.mxu0 0.0
  %181 = vmatpush.msra.mxu0 0.0
  %182 = vmatpush.msra.mxu0 0.0
  %183 = vmatpush.msra.mxu0 0.0
  %184 = vmatpush.msra.mxu0 0.0
  %185 = vmatpush.msra.mxu0 0.0
  %186 = vmatpush.msra.mxu0 0.0
  %187 = vmatpush.msra.mxu0 %v70
  %188 = vmatmul.f32.gmra.mxu0 %v77
  %v189 = vpop.f32.mrf.mxu0
  %v190 = vadd.f32 %v73, %v189
  %191 = vmatmul.f32.gmra.mxu0 %v80
  %v192 = vpop.f32.mrf.mxu0
  %v193 = vadd.f32 %v73, %v192
  %194 = vmatmul.f32.gmra.mxu0 %v83
  %v195 = vpop.f32.mrf.mxu0
  %v196 = vadd.f32 %v73, %v195
  %197 = vmatmul.f32.gmra.mxu0 %v86
  %v198 = vpop.f32.mrf.mxu0
  %v199 = vadd.f32 %v73, %v198
  %200 = vmatmul.f32.gmra.mxu0 %v89
  %v201 = vpop.f32.mrf.mxu0
  %v202 = vadd.f32 %v73, %v201
  %203 = vmatmul.f32.gmra.mxu0 %v92
  %v204 = vpop.f32.mrf.mxu0
  %v205 = vadd.f32 %v73, %v204
  %206 = vmatmul.f32.gmra.mxu0 %v95
  %v207 = vpop.f32.mrf.mxu0
  %v208 = vadd.f32 %v73, %v207
  %209 = vmatmul.f32.gmra.mxu0 %v98
  %v210 = vpop.f32.mrf.mxu0
  %v211 = vadd.f32 %v73, %v210
  %212 = vmatmul.f32.gmra.mxu0 %v101
  %v213 = vpop.f32.mrf.mxu0
  %v214 = vadd.f32 %v73, %v213
  %215 = vmatmul.f32.gmra.mxu0 %v104
  %v216 = vpop.f32.mrf.mxu0
  %v217 = vadd.f32 %v73, %v216
  %218 = vmatmul.f32.gmra.mxu0 %v107
  %v219 = vpop.f32.mrf.mxu0
  %v220 = vadd.f32 %v73, %v219
  %221 = vmatmul.f32.gmra.mxu0 %v110
  %v222 = vpop.f32.mrf.mxu0
  %v223 = vadd.f32 %v73, %v222
  %224 = vmatmul.f32.gmra.mxu0 %v113
  %v225 = vpop.f32.mrf.mxu0
  %v226 = vadd.f32 %v73, %v225
  %227 = vmatmul.f32.gmra.mxu0 %v116
  %v228 = vpop.f32.mrf.mxu0
  %v229 = vadd.f32 %v73, %v228
  %230 = vmatmul.f32.gmra.mxu0 %v119
  %v231 = vpop.f32.mrf.mxu0
  %v232 = vadd.f32 %v73, %v231
  %233 = vmatmul.f32.gmra.mxu0 %v122
  %v234 = vpop.f32.mrf.mxu0
  %v235 = vadd.f32 %v73, %v234
  %236 = vmatmul.f32.gmra.mxu0 %v125
  %v237 = vpop.f32.mrf.mxu0
  %v238 = vadd.f32 %v73, %v237
  %239 = vmatmul.f32.gmra.mxu0 %v128
  %v240 = vpop.f32.mrf.mxu0
  %v241 = vadd.f32 %v73, %v240
  %242 = vmatmul.f32.gmra.mxu0 %v131
  %v243 = vpop.f32.mrf.mxu0
  %v244 = vadd.f32 %v73, %v243
  %245 = vmatmul.f32.gmra.mxu0 %v134
  %v246 = vpop.f32.mrf.mxu0
  %v247 = vadd.f32 %v73, %v246
  %248 = vmatmul.f32.gmra.mxu0 %v137
  %v249 = vpop.f32.mrf.mxu0
  %v250 = vadd.f32 %v73, %v249
  %251 = vmatmul.f32.gmra.mxu0 %v140
  %v252 = vpop.f32.mrf.mxu0
  %v253 = vadd.f32 %v73, %v252
  %254 = vmatmul.f32.gmra.mxu0 %v143
  %v255 = vpop.f32.mrf.mxu0
  %v256 = vadd.f32 %v73, %v255
  %257 = vmatmul.f32.gmra.mxu0 %v146
  %v258 = vpop.f32.mrf.mxu0
  %v259 = vadd.f32 %v73, %v258
  %260 = vmatmul.f32.gmra.mxu0 %v149
  %v261 = vpop.f32.mrf.mxu0
  %v262 = vadd.f32 %v73, %v261
  %263 = vmatmul.f32.gmra.mxu0 %v152
  %v264 = vpop.f32.mrf.mxu0
  %v265 = vadd.f32 %v73, %v264
  %266 = vmatmul.f32.gmra.mxu0 %v155
  %v267 = vpop.f32.mrf.mxu0
  %v268 = vadd.f32 %v73, %v267
  %269 = vmatmul.f32.gmra.mxu0 %v158
  %v270 = vpop.f32.mrf.mxu0
  %v271 = vadd.f32 %v73, %v270
  %272 = vmatmul.f32.gmra.mxu0 %v161
  %v273 = vpop.f32.mrf.mxu0
  %v274 = vadd.f32 %v73, %v273
  %275 = vmatmul.f32.gmra.mxu0 %v164
  %v276 = vpop.f32.mrf.mxu0
  %v277 = vadd.f32 %v73, %v276
  %278 = vmatmul.f32.gmra.mxu0 %v167
  %v279 = vpop.f32.mrf.mxu0
  %v280 = vadd.f32 %v73, %v279
  %281 = vmatmul.f32.gmra.mxu0 %v170
  %v282 = vpop.f32.mrf.mxu0
  %v283 = vadd.f32 %v73, %v282
  %284 = vdwg.mxu0
  %v285 = vmax.f32 %v190, 0.0
  %v286 = vmax.f32 %v193, 0.0
  %v287 = vmax.f32 %v196, 0.0
  %v288 = vmax.f32 %v199, 0.0
  %v289 = vmax.f32 %v202, 0.0
  %v290 = vmax.f32 %v205, 0.0
  %v291 = vmax.f32 %v208, 0.0
  %v292 = vmax.f32 %v211, 0.0
  %v293 = vmax.f32 %v214, 0.0
  %v294 = vmax.f32 %v217, 0.0
  %v295 = vmax.f32 %v220, 0.0
  %v296 = vmax.f32 %v223, 0.0
  %v297 = vmax.f32 %v226, 0.0
  %v298 = vmax.f32 %v229, 0.0
  %v299 = vmax.f32 %v232, 0.0
  %v300 = vmax.f32 %v235, 0.0
  %v301 = vmax.f32 %v238, 0.0
  %v302 = vmax.f32 %v241, 0.0
  %v303 = vmax.f32 %v244, 0.0
  %v304 = vmax.f32 %v247, 0.0
  %v305 = vmax.f32 %v250, 0.0
  %v306 = vmax.f32 %v253, 0.0
  %v307 = vmax.f32 %v256, 0.0
  %v308 = vmax.f32 %v259, 0.0
  %v309 = vmax.f32 %v262, 0.0
  %v310 = vmax.f32 %v265, 0.0
  %v311 = vmax.f32 %v268, 0.0
  %v312 = vmax.f32 %v271, 0.0
  %v313 = vmax.f32 %v274, 0.0
  %v314 = vmax.f32 %v277, 0.0
  %v315 = vmax.f32 %v280, 0.0
  %v316 = vmax.f32 %v283, 0.0
  %v317 = vld [vmem:[%s5] sm:$0xff]
  %v318 = vld [vmem:[%s5 + $0x8] sm:$0xff]
  %v319 = vld [vmem:[%s5 + $0x10] sm:$0xff]
  %v320 = vld [vmem:[%s5 + $0x18] sm:$0xff]
  %v321 = vld [vmem:[%s6] sm:$0x1]
  %v323 = vperm.slane %v321, 0
  %vm325 = vcmask 261120
  %v327 = vsel %vm325, %v285, 0
  %v330 = vsel %vm325, %v286, 0
  %v333 = vsel %vm325, %v287, 0
  %v336 = vsel %vm325, %v288, 0
  %v339 = vsel %vm325, %v289, 0
  %v342 = vsel %vm325, %v290, 0
  %v345 = vsel %vm325, %v291, 0
  %v348 = vsel %vm325, %v292, 0
  %v351 = vsel %vm325, %v293, 0
  %v354 = vsel %vm325, %v294, 0
  %v357 = vsel %vm325, %v295, 0
  %v360 = vsel %vm325, %v296, 0
  %v363 = vsel %vm325, %v297, 0
  %v366 = vsel %vm325, %v298, 0
  %v369 = vsel %vm325, %v299, 0
  %v372 = vsel %vm325, %v300, 0
  %v375 = vsel %vm325, %v301, 0
  %v378 = vsel %vm325, %v302, 0
  %v381 = vsel %vm325, %v303, 0
  %v384 = vsel %vm325, %v304, 0
  %v387 = vsel %vm325, %v305, 0
  %v390 = vsel %vm325, %v306, 0
  %v393 = vsel %vm325, %v307, 0
  %v396 = vsel %vm325, %v308, 0
  %v399 = vsel %vm325, %v309, 0
  %v402 = vsel %vm325, %v310, 0
  %v405 = vsel %vm325, %v311, 0
  %v408 = vsel %vm325, %v312, 0
  %v411 = vsel %vm325, %v313, 0
  %v414 = vsel %vm325, %v314, 0
  %v417 = vsel %vm325, %v315, 0
  %v420 = vsel %vm325, %v316, 0
  %422 = vmatpush.msra.mxu0 0.0
  %423 = vmatpush.msra.mxu0 0.0
  %424 = vmatpush.msra.mxu0 0.0
  %425 = vmatpush.msra.mxu0 0.0
  %426 = vmatpush.msra.mxu0 0.0
  %427 = vmatpush.msra.mxu0 0.0
  %428 = vmatpush.msra.mxu0 0.0
  %429 = vmatpush.msra.mxu0 0.0
  %430 = vmatpush.msra.mxu0 0.0
  %431 = vmatpush.msra.mxu0 0.0
  %432 = vmatpush.msra.mxu0 0.0
  %433 = vmatpush.msra.mxu0 0.0
  %434 = vmatpush.msra.mxu0 %v320
  %435 = vmatpush.msra.mxu0 %v319
  %436 = vmatpush.msra.mxu0 %v318
  %437 = vmatpush.msra.mxu0 %v317
  %438 = vmatmul.f32.gmra.mxu0 %v327
  %v439 = vpop.f32.mrf.mxu0
  %v440 = vadd.f32 %v323, %v439
  %441 = vmatmul.f32.gmra.mxu0 %v330
  %v442 = vpop.f32.mrf.mxu0
  %v443 = vadd.f32 %v323, %v442
  %444 = vmatmul.f32.gmra.mxu0 %v333
  %v445 = vpop.f32.mrf.mxu0
  %v446 = vadd.f32 %v323, %v445
  %447 = vmatmul.f32.gmra.mxu0 %v336
  %v448 = vpop.f32.mrf.mxu0
  %v449 = vadd.f32 %v323, %v448
  %450 = vmatmul.f32.gmra.mxu0 %v339
  %v451 = vpop.f32.mrf.mxu0
  %v452 = vadd.f32 %v323, %v451
  %453 = vmatmul.f32.gmra.mxu0 %v342
  %v454 = vpop.f32.mrf.mxu0
  %v455 = vadd.f32 %v323, %v454
  %456 = vmatmul.f32.gmra.mxu0 %v345
  %v457 = vpop.f32.mrf.mxu0
  %v458 = vadd.f32 %v323, %v457
  %459 = vmatmul.f32.gmra.mxu0 %v348
  %v460 = vpop.f32.mrf.mxu0
  %v461 = vadd.f32 %v323, %v460
  %462 = vmatmul.f32.gmra.mxu0 %v351
  %v463 = vpop.f32.mrf.mxu0
  %v464 = vadd.f32 %v323, %v463
  %465 = vmatmul.f32.gmra.mxu0 %v354
  %v466 = vpop.f32.mrf.mxu0
  %v467 = vadd.f32 %v323, %v466
  %468 = vmatmul.f32.gmra.mxu0 %v357
  %v469 = vpop.f32.mrf.mxu0
  %v470 = vadd.f32 %v323, %v469
  %471 = vmatmul.f32.gmra.mxu0 %v360
  %v472 = vpop.f32.mrf.mxu0
  %v473 = vadd.f32 %v323, %v472
  %474 = vmatmul.f32.gmra.mxu0 %v363
  %v475 = vpop.f32.mrf.mxu0
  %v476 = vadd.f32 %v323, %v475
  %477 = vmatmul.f32.gmra.mxu0 %v366
  %v478 = vpop.f32.mrf.mxu0
  %v479 = vadd.f32 %v323, %v478
  %480 = vmatmul.f32.gmra.mxu0 %v369
  %v481 = vpop.f32.mrf.mxu0
  %v482 = vadd.f32 %v323, %v481
  %483 = vmatmul.f32.gmra.mxu0 %v372
  %v484 = vpop.f32.mrf.mxu0
  %v485 = vadd.f32 %v323, %v484
  %486 = vmatmul.f32.gmra.mxu0 %v375
  %v487 = vpop.f32.mrf.mxu0
  %v488 = vadd.f32 %v323, %v487
  %489 = vmatmul.f32.gmra.mxu0 %v378
  %v490 = vpop.f32.mrf.mxu0
  %v491 = vadd.f32 %v323, %v490
  %492 = vmatmul.f32.gmra.mxu0 %v381
  %v493 = vpop.f32.mrf.mxu0
  %v494 = vadd.f32 %v323, %v493
  %495 = vmatmul.f32.gmra.mxu0 %v384
  %v496 = vpop.f32.mrf.mxu0
  %v497 = vadd.f32 %v323, %v496
  %498 = vmatmul.f32.gmra.mxu0 %v387
  %v499 = vpop.f32.mrf.mxu0
  %v500 = vadd.f32 %v323, %v499
  %501 = vmatmul.f32.gmra.mxu0 %v390
  %v502 = vpop.f32.mrf.mxu0
  %v503 = vadd.f32 %v323, %v502
  %504 = vmatmul.f32.gmra.mxu0 %v393
  %v505 = vpop.f32.mrf.mxu0
  %v506 = vadd.f32 %v323, %v505
  %507 = vmatmul.f32.gmra.mxu0 %v396
  %v508 = vpop.f32.mrf.mxu0
  %v509 = vadd.f32 %v323, %v508
  %510 = vmatmul.f32.gmra.mxu0 %v399
  %v511 = vpop.f32.mrf.mxu0
  %v512 = vadd.f32 %v323, %v511
  %513 = vmatmul.f32.gmra.mxu0 %v402
  %v514 = vpop.f32.mrf.mxu0
  %v515 = vadd.f32 %v323, %v514
  %516 = vmatmul.f32.gmra.mxu0 %v405
  %v517 = vpop.f32.mrf.mxu0
  %v518 = vadd.f32 %v323, %v517
  %519 = vmatmul.f32.gmra.mxu0 %v408
  %v520 = vpop.f32.mrf.mxu0
  %v521 = vadd.f32 %v323, %v520
  %522 = vmatmul.f32.gmra.mxu0 %v411
  %v523 = vpop.f32.mrf.mxu0
  %v524 = vadd.f32 %v323, %v523
  %525 = vmatmul.f32.gmra.mxu0 %v414
  %v526 = vpop.f32.mrf.mxu0
  %v527 = vadd.f32 %v323, %v526
  %528 = vmatmul.f32.gmra.mxu0 %v417
  %v529 = vpop.f32.mrf.mxu0
  %v530 = vadd.f32 %v323, %v529
  %531 = vmatmul.f32.gmra.mxu0 %v420
  %v532 = vpop.f32.mrf.mxu0
  %v533 = vadd.f32 %v323, %v532
  %534 = vdwg.mxu0
  %v535 = vsel %vm325, %v440, -inf
  %v536 = vsel %vm325, %v443, -inf
  %v537 = vmax.f32 %v535, %v536
  %v538 = vrot.slane %v537, 4
  %v539 = vmax.f32 %v537, %v538
  %v540 = vrot.slane %v539, 2
  %v541 = vmax.f32 %v539, %v540
  %v542 = vrot.slane %v541, 1
  %v543 = vmax.f32 %v541, %v542
  %v544 = vsel %vm325, %v446, -inf
  %v545 = vsel %vm325, %v449, -inf
  %v546 = vmax.f32 %v544, %v545
  %v547 = vrot.slane %v546, 4
  %v548 = vmax.f32 %v546, %v547
  %v549 = vrot.slane %v548, 2
  %v550 = vmax.f32 %v548, %v549
  %v551 = vrot.slane %v550, 1
  %v552 = vmax.f32 %v550, %v551
  %v553 = vsel %vm325, %v452, -inf
  %v554 = vsel %vm325, %v455, -inf
  %v555 = vmax.f32 %v553, %v554
  %v556 = vrot.slane %v555, 4
  %v557 = vmax.f32 %v555, %v556
  %v558 = vrot.slane %v557, 2
  %v559 = vmax.f32 %v557, %v558
  %v560 = vrot.slane %v559, 1
  %v561 = vmax.f32 %v559, %v560
  %v562 = vsel %vm325, %v458, -inf
  %v563 = vsel %vm325, %v461, -inf
  %v564 = vmax.f32 %v562, %v563
  %v565 = vrot.slane %v564, 4
  %v566 = vmax.f32 %v564, %v565
  %v567 = vrot.slane %v566, 2
  %v568 = vmax.f32 %v566, %v567
  %v569 = vrot.slane %v568, 1
  %v570 = vmax.f32 %v568, %v569
  %v571 = vsel %vm325, %v464, -inf
  %v572 = vsel %vm325, %v467, -inf
  %v573 = vmax.f32 %v571, %v572
  %v574 = vrot.slane %v573, 4
  %v575 = vmax.f32 %v573, %v574
  %v576 = vrot.slane %v575, 2
  %v577 = vmax.f32 %v575, %v576
  %v578 = vrot.slane %v577, 1
  %v579 = vmax.f32 %v577, %v578
  %v580 = vsel %vm325, %v470, -inf
  %v581 = vsel %vm325, %v473, -inf
  %v582 = vmax.f32 %v580, %v581
  %v583 = vrot.slane %v582, 4
  %v584 = vmax.f32 %v582, %v583
  %v585 = vrot.slane %v584, 2
  %v586 = vmax.f32 %v584, %v585
  %v587 = vrot.slane %v586, 1
  %v588 = vmax.f32 %v586, %v587
  %v589 = vsel %vm325, %v476, -inf
  %v590 = vsel %vm325, %v479, -inf
  %v591 = vmax.f32 %v589, %v590
  %v592 = vrot.slane %v591, 4
  %v593 = vmax.f32 %v591, %v592
  %v594 = vrot.slane %v593, 2
  %v595 = vmax.f32 %v593, %v594
  %v596 = vrot.slane %v595, 1
  %v597 = vmax.f32 %v595, %v596
  %v598 = vsel %vm325, %v482, -inf
  %v599 = vsel %vm325, %v485, -inf
  %v600 = vmax.f32 %v598, %v599
  %v601 = vrot.slane %v600, 4
  %v602 = vmax.f32 %v600, %v601
  %v603 = vrot.slane %v602, 2
  %v604 = vmax.f32 %v602, %v603
  %v605 = vrot.slane %v604, 1
  %v606 = vmax.f32 %v604, %v605
  %v607 = vsel %vm325, %v488, -inf
  %v608 = vsel %vm325, %v491, -inf
  %v609 = vmax.f32 %v607, %v608
  %v610 = vrot.slane %v609, 4
  %v611 = vmax.f32 %v609, %v610
  %v612 = vrot.slane %v611, 2
  %v613 = vmax.f32 %v611, %v612
  %v614 = vrot.slane %v613, 1
  %v615 = vmax.f32 %v613, %v614
  %v616 = vsel %vm325, %v494, -inf
  %v617 = vsel %vm325, %v497, -inf
  %v618 = vmax.f32 %v616, %v617
  %v619 = vrot.slane %v618, 4
  %v620 = vmax.f32 %v618, %v619
  %v621 = vrot.slane %v620, 2
  %v622 = vmax.f32 %v620, %v621
  %v623 = vrot.slane %v622, 1
  %v624 = vmax.f32 %v622, %v623
  %v625 = vsel %vm325, %v500, -inf
  %v626 = vsel %vm325, %v503, -inf
  %v627 = vmax.f32 %v625, %v626
  %v628 = vrot.slane %v627, 4
  %v629 = vmax.f32 %v627, %v628
  %v630 = vrot.slane %v629, 2
  %v631 = vmax.f32 %v629, %v630
  %v632 = vrot.slane %v631, 1
  %v633 = vmax.f32 %v631, %v632
  %v634 = vsel %vm325, %v506, -inf
  %v635 = vsel %vm325, %v509, -inf
  %v636 = vmax.f32 %v634, %v635
  %v637 = vrot.slane %v636, 4
  %v638 = vmax.f32 %v636, %v637
  %v639 = vrot.slane %v638, 2
  %v640 = vmax.f32 %v638, %v639
  %v641 = vrot.slane %v640, 1
  %v642 = vmax.f32 %v640, %v641
  %v643 = vsel %vm325, %v512, -inf
  %v644 = vsel %vm325, %v515, -inf
  %v645 = vmax.f32 %v643, %v644
  %v646 = vrot.slane %v645, 4
  %v647 = vmax.f32 %v645, %v646
  %v648 = vrot.slane %v647, 2
  %v649 = vmax.f32 %v647, %v648
  %v650 = vrot.slane %v649, 1
  %v651 = vmax.f32 %v649, %v650
  %v652 = vsel %vm325, %v518, -inf
  %v653 = vsel %vm325, %v521, -inf
  %v654 = vmax.f32 %v652, %v653
  %v655 = vrot.slane %v654, 4
  %v656 = vmax.f32 %v654, %v655
  %v657 = vrot.slane %v656, 2
  %v658 = vmax.f32 %v656, %v657
  %v659 = vrot.slane %v658, 1
  %v660 = vmax.f32 %v658, %v659
  %v661 = vsel %vm325, %v524, -inf
  %v662 = vsel %vm325, %v527, -inf
  %v663 = vmax.f32 %v661, %v662
  %v664 = vrot.slane %v663, 4
  %v665 = vmax.f32 %v663, %v664
  %v666 = vrot.slane %v665, 2
  %v667 = vmax.f32 %v665, %v666
  %v668 = vrot.slane %v667, 1
  %v669 = vmax.f32 %v667, %v668
  %v670 = vsel %vm325, %v530, -inf
  %v671 = vsel %vm325, %v533, -inf
  %v672 = vmax.f32 %v670, %v671
  %v673 = vrot.slane %v672, 4
  %v674 = vmax.f32 %v672, %v673
  %v675 = vrot.slane %v674, 2
  %v676 = vmax.f32 %v674, %v675
  %v677 = vrot.slane %v676, 1
  %v678 = vmax.f32 %v676, %v677
  %v679 = vld [vmem:[%s1] sm:$0xff]
  %v680 = vld [vmem:[%s1 + $0x8] sm:$0xff]
  %v681 = vsel %vm75, %v679, 0.0
  %682 = vadd.xlane.f32.xlu0 %v681
  %v683 = vpop.xlane.xlu0 %682
  %v684 = vsel %vm75, %v680, 0.0
  %685 = vadd.xlane.f32.xlu0 %v684
  %v686 = vpop.xlane.xlu0 %685
  %vm687 = vcmp.ne.f32.partialorder %v683, 0.0
  %vm688 = vcmp.ne.f32.partialorder %v686, 0.0
  %v689 = vsel %vm687, 1, 0
  %v690 = vsel %vm688, 1, 0
  %v691 = vcvt.s32.f32 %v689
  %v692 = vcvt.s32.f32 %v690
  %v695 = vrot.slane %v691, 1
  %v696 = vrot.slane %v691, 2
  %v697 = vrot.slane %v691, 3
  %v698 = vrot.slane %v691, 4
  %v699 = vrot.slane %v691, 5
  %v700 = vrot.slane %v691, 6
  %v701 = vrot.slane %v691, 7
  %v702 = vrot.slane %v692, 1
  %v703 = vrot.slane %v692, 2
  %v704 = vrot.slane %v692, 3
  %v705 = vrot.slane %v692, 4
  %v706 = vrot.slane %v692, 5
  %v707 = vrot.slane %v692, 6
  %v708 = vrot.slane %v692, 7
  %v725 = vmul.f32 %v543, %v691
  %v726 = vmul.f32 %v552, %v695
  %v727 = vmul.f32 %v561, %v696
  %v728 = vmul.f32 %v570, %v697
  %v729 = vmul.f32 %v579, %v698
  %v730 = vmul.f32 %v588, %v699
  %v731 = vmul.f32 %v597, %v700
  %v732 = vmul.f32 %v606, %v701
  %v733 = vmul.f32 %v615, %v692
  %v734 = vmul.f32 %v624, %v702
  %v735 = vmul.f32 %v633, %v703
  %v736 = vmul.f32 %v642, %v704
  %v737 = vmul.f32 %v651, %v705
  %v738 = vmul.f32 %v660, %v706
  %v739 = vmul.f32 %v669, %v707
  %v740 = vmul.f32 %v678, %v708
  %v741 = vld [vmem:[%s2] sm:$0xff]
  %v742 = vld [vmem:[%s2 + $0x8] sm:$0xff]
  %v745 = vrot.slane %v741, 1
  %v746 = vrot.slane %v741, 2
  %v747 = vrot.slane %v741, 3
  %v748 = vrot.slane %v741, 4
  %v749 = vrot.slane %v741, 5
  %v750 = vrot.slane %v741, 6
  %v751 = vrot.slane %v741, 7
  %v752 = vrot.slane %v742, 1
  %v753 = vrot.slane %v742, 2
  %v754 = vrot.slane %v742, 3
  %v755 = vrot.slane %v742, 4
  %v756 = vrot.slane %v742, 5
  %v757 = vrot.slane %v742, 6
  %v758 = vrot.slane %v742, 7
  %v775 = vadd.f32 %v725, %v741
  %v776 = vadd.f32 %v726, %v745
  %v777 = vadd.f32 %v727, %v746
  %v778 = vadd.f32 %v728, %v747
  %v779 = vadd.f32 %v729, %v748
  %v780 = vadd.f32 %v730, %v749
  %v781 = vadd.f32 %v731, %v750
  %v782 = vadd.f32 %v732, %v751
  %v783 = vadd.f32 %v733, %v742
  %v784 = vadd.f32 %v734, %v752
  %v785 = vadd.f32 %v735, %v753
  %v786 = vadd.f32 %v736, %v754
  %v787 = vadd.f32 %v737, %v755
  %v788 = vadd.f32 %v738, %v756
  %v789 = vadd.f32 %v739, %v757
  %v790 = vadd.f32 %v740, %v758
  %v791 = vmul.f32 %v775, %v691
  %v792 = vmul.f32 %v776, %v695
  %v793 = vmul.f32 %v777, %v696
  %v794 = vmul.f32 %v778, %v697
  %v795 = vmul.f32 %v779, %v698
  %v796 = vmul.f32 %v780, %v699
  %v797 = vmul.f32 %v781, %v700
  %v798 = vmul.f32 %v782, %v701
  %v799 = vmul.f32 %v783, %v692
  %v800 = vmul.f32 %v784, %v702
  %v801 = vmul.f32 %v785, %v703
  %v802 = vmul.f32 %v786, %v704
  %v803 = vmul.f32 %v787, %v705
  %v804 = vmul.f32 %v788, %v706
  %v805 = vmul.f32 %v789, %v707
  %v806 = vmul.f32 %v790, %v708
  %vm807 = vcmp.gt.f32.partialorder %v691, 0.0
  %vm808 = vcmp.gt.f32.partialorder %v692, 0.0
  %v809 = vsel %vm807, 1, 0
  %v810 = vsel %vm808, 1, 0
  %vm811 = vcmp.eq.s32.totalorder %v809, 1
  %vm812 = vcmp.eq.s32.totalorder %v810, 1
  %v829 = vrot.slane %v792, 7
  %vm830 = vcmask 1041409
  %v831 = vsel %vm830, %v829, %v791
  %v832 = vrot.slane %v793, 6
  %vm833 = vcmask 1042434
  %v834 = vsel %vm833, %v832, %v831
  %v835 = vrot.slane %v794, 5
  %vm836 = vcmask 1043459
  %v837 = vsel %vm836, %v835, %v834
  %v838 = vrot.slane %v795, 4
  %vm839 = vcmask 1044484
  %v840 = vsel %vm839, %v838, %v837
  %v841 = vrot.slane %v796, 3
  %vm842 = vcmask 1045509
  %v843 = vsel %vm842, %v841, %v840
  %v844 = vrot.slane %v797, 2
  %vm845 = vcmask 1046534
  %v846 = vsel %vm845, %v844, %v843
  %v847 = vrot.slane %v798, 1
  %vm848 = vcmask 1047559
  %v849 = vsel %vm848, %v847, %v846
  %v850 = vrot.slane %v800, 7
  %v851 = vsel %vm830, %v850, %v799
  %v852 = vrot.slane %v801, 6
  %v853 = vsel %vm833, %v852, %v851
  %v854 = vrot.slane %v802, 5
  %v855 = vsel %vm836, %v854, %v853
  %v856 = vrot.slane %v803, 4
  %v857 = vsel %vm839, %v856, %v855
  %v858 = vrot.slane %v804, 3
  %v859 = vsel %vm842, %v858, %v857
  %v860 = vrot.slane %v805, 2
  %v861 = vsel %vm845, %v860, %v859
  %v862 = vrot.slane %v806, 1
  %v863 = vsel %vm848, %v862, %v861
  %v866 = vsel %vm811, %v849, -1e+30
  %v867 = vsel %vm812, %v863, -1e+30
  %v868 = vsel %vm325, %v866, -inf
  %v869 = vrot.slane %v868, 4
  %v870 = vmax.f32 %v868, %v869
  %v871 = vrot.slane %v870, 2
  %v872 = vmax.f32 %v870, %v871
  %v873 = vrot.slane %v872, 1
  %v874 = vmax.f32 %v872, %v873
  %v875 = vsel %vm325, %v867, -inf
  %v876 = vrot.slane %v875, 4
  %v877 = vmax.f32 %v875, %v876
  %v878 = vrot.slane %v877, 2
  %v879 = vmax.f32 %v877, %v878
  %v880 = vrot.slane %v879, 1
  %v881 = vmax.f32 %v879, %v880
  %v882 = vadd.f32 %v791, %v874
  %v883 = vadd.f32 %v792, %v874
  %v884 = vadd.f32 %v793, %v874
  %v885 = vadd.f32 %v794, %v874
  %v886 = vadd.f32 %v795, %v874
  %v887 = vadd.f32 %v796, %v874
  %v888 = vadd.f32 %v797, %v874
  %v889 = vadd.f32 %v798, %v874
  %v890 = vadd.f32 %v799, %v881
  %v891 = vadd.f32 %v800, %v881
  %v892 = vadd.f32 %v801, %v881
  %v893 = vadd.f32 %v802, %v881
  %v894 = vadd.f32 %v803, %v881
  %v895 = vadd.f32 %v804, %v881
  %v896 = vadd.f32 %v805, %v881
  %v897 = vadd.f32 %v806, %v881
  %v898 = vmul.f32 %v882, %v691
  %v899 = vmul.f32 %v883, %v695
  %v900 = vmul.f32 %v884, %v696
  %v901 = vmul.f32 %v885, %v697
  %v902 = vmul.f32 %v886, %v698
  %v903 = vmul.f32 %v887, %v699
  %v904 = vmul.f32 %v888, %v700
  %v905 = vmul.f32 %v889, %v701
  %v906 = vmul.f32 %v890, %v692
  %v907 = vmul.f32 %v891, %v702
  %v908 = vmul.f32 %v892, %v703
  %v909 = vmul.f32 %v893, %v704
  %v910 = vmul.f32 %v894, %v705
  %v911 = vmul.f32 %v895, %v706
  %v912 = vmul.f32 %v896, %v707
  %v913 = vmul.f32 %v897, %v708
  %vm914 = vcmask 253952
  %v915 = vsel %vm914, %v898, -inf
  %v916 = vsel %vm914, %v899, -inf
  %v917 = vsel %vm914, %v900, -inf
  %v918 = vmax.f32 %v915, %v917
  %v919 = vsel %vm914, %v901, -inf
  %v920 = vmax.f32 %v916, %v919
  %v921 = vsel %vm914, %v902, -inf
  %v922 = vmax.f32 %v918, %v921
  %v923 = vsel %vm914, %v903, -inf
  %v924 = vmax.f32 %v920, %v923
  %v925 = vsel %vm914, %v904, -inf
  %v926 = vmax.f32 %v922, %v925
  %v927 = vsel %vm914, %v905, -inf
  %v928 = vmax.f32 %v924, %v927
  %v929 = vmax.f32 %v926, %v928
  %v930 = vsel %vm914, %v906, -inf
  %v931 = vsel %vm914, %v907, -inf
  %v932 = vsel %vm914, %v908, -inf
  %v933 = vmax.f32 %v930, %v932
  %v934 = vsel %vm914, %v909, -inf
  %v935 = vmax.f32 %v931, %v934
  %v936 = vsel %vm914, %v910, -inf
  %v937 = vmax.f32 %v933, %v936
  %v938 = vsel %vm914, %v911, -inf
  %v939 = vmax.f32 %v935, %v938
  %v940 = vsel %vm914, %v912, -inf
  %v941 = vmax.f32 %v937, %v940
  %v942 = vsel %vm914, %v913, -inf
  %v943 = vmax.f32 %v939, %v942
  %v944 = vmax.f32 %v941, %v943
  %v945 = vld [vmem:[%s7] sm:$0xff]
  %v946 = vld [vmem:[%s7 + $0x8] sm:$0xff]
  %v947 = vld [vmem:[%s7 + $0x10] sm:$0xff]
  %v948 = vld [vmem:[%s7 + $0x18] sm:$0xff]
  %v949 = vld [vmem:[%s8] sm:$0x1]
  %v951 = vperm.slane %v949, 0
  %v969 = vrot.slane %v899, 7
  %v970 = vsel %vm830, %v969, %v898
  %v971 = vrot.slane %v900, 6
  %v972 = vsel %vm833, %v971, %v970
  %v973 = vrot.slane %v901, 5
  %v974 = vsel %vm836, %v973, %v972
  %v975 = vrot.slane %v902, 4
  %v976 = vsel %vm839, %v975, %v974
  %v977 = vrot.slane %v903, 3
  %v978 = vsel %vm842, %v977, %v976
  %v979 = vrot.slane %v904, 2
  %v980 = vsel %vm845, %v979, %v978
  %v981 = vrot.slane %v905, 1
  %v982 = vsel %vm848, %v981, %v980
  %v983 = vrot.slane %v907, 7
  %v984 = vsel %vm830, %v983, %v906
  %v985 = vrot.slane %v908, 6
  %v986 = vsel %vm833, %v985, %v984
  %v987 = vrot.slane %v909, 5
  %v988 = vsel %vm836, %v987, %v986
  %v989 = vrot.slane %v910, 4
  %v990 = vsel %vm839, %v989, %v988
  %v991 = vrot.slane %v911, 3
  %v992 = vsel %vm842, %v991, %v990
  %v993 = vrot.slane %v912, 2
  %v994 = vsel %vm845, %v993, %v992
  %v995 = vrot.slane %v913, 1
  %v996 = vsel %vm848, %v995, %v994
  %v997 = vsel %vm325, %v982, 0
  %v999 = vsel %vm325, %v996, 0
  %1001 = vmatpush.msra.mxu0 0.0
  %1002 = vmatpush.msra.mxu0 0.0
  %1003 = vmatpush.msra.mxu0 0.0
  %1004 = vmatpush.msra.mxu0 0.0
  %1005 = vmatpush.msra.mxu0 0.0
  %1006 = vmatpush.msra.mxu0 0.0
  %1007 = vmatpush.msra.mxu0 0.0
  %1008 = vmatpush.msra.mxu0 0.0
  %1009 = vmatpush.msra.mxu0 0.0
  %1010 = vmatpush.msra.mxu0 0.0
  %1011 = vmatpush.msra.mxu0 0.0
  %1012 = vmatpush.msra.mxu0 0.0
  %1013 = vmatpush.msra.mxu0 %v948
  %1014 = vmatpush.msra.mxu0 %v947
  %1015 = vmatpush.msra.mxu0 %v946
  %1016 = vmatpush.msra.mxu0 %v945
  %1017 = vmatmul.f32.gmra.mxu0 %v997
  %v1018 = vpop.f32.mrf.mxu0
  %v1019 = vadd.f32 %v951, %v1018
  %1020 = vmatmul.f32.gmra.mxu0 %v999
  %v1021 = vpop.f32.mrf.mxu0
  %v1022 = vadd.f32 %v951, %v1021
  %1023 = vdwg.mxu0
  %v1024 = vmax.f32 %v1019, 0.0
  %v1025 = vmax.f32 %v1022, 0.0
  %v1026 = vld [vmem:[%s9] sm:$0xff]
  %v1027 = vld [vmem:[%s9 + $0x8] sm:$0xff]
  %v1028 = vld [vmem:[%s9 + $0x10] sm:$0xff]
  %v1029 = vld [vmem:[%s9 + $0x18] sm:$0xff]
  %v1030 = vld [vmem:[%s9 + $0x20] sm:$0xff]
  %v1031 = vld [vmem:[%s9 + $0x28] sm:$0xff]
  %v1032 = vld [vmem:[%s9 + $0x30] sm:$0xff]
  %v1033 = vld [vmem:[%s9 + $0x38] sm:$0xff]
  %v1034 = vld [vmem:[%s10] sm:$0x1]
  %v1036 = vperm.slane %v1034, 0
  %vm1038 = vcmask 523264
  %v1040 = vsel %vm1038, %v1024, 0
  %v1043 = vsel %vm1038, %v1025, 0
  %1045 = vmatpush.msra.mxu0 0.0
  %1046 = vmatpush.msra.mxu0 0.0
  %1047 = vmatpush.msra.mxu0 0.0
  %1048 = vmatpush.msra.mxu0 0.0
  %1049 = vmatpush.msra.mxu0 0.0
  %1050 = vmatpush.msra.mxu0 0.0
  %1051 = vmatpush.msra.mxu0 0.0
  %1052 = vmatpush.msra.mxu0 0.0
  %1053 = vmatpush.msra.mxu0 %v1033
  %1054 = vmatpush.msra.mxu0 %v1032
  %1055 = vmatpush.msra.mxu0 %v1031
  %1056 = vmatpush.msra.mxu0 %v1030
  %1057 = vmatpush.msra.mxu0 %v1029
  %1058 = vmatpush.msra.mxu0 %v1028
  %1059 = vmatpush.msra.mxu0 %v1027
  %1060 = vmatpush.msra.mxu0 %v1026
  %1061 = vmatmul.f32.gmra.mxu0 %v1040
  %v1062 = vpop.f32.mrf.mxu0
  %v1063 = vadd.f32 %v1036, %v1062
  %1064 = vmatmul.f32.gmra.mxu0 %v1043
  %v1065 = vpop.f32.mrf.mxu0
  %v1066 = vadd.f32 %v1036, %v1065
  %1067 = vdwg.mxu0
  %v1070 = vrot.slane %v944, 7
  %v1071 = vsel %vm830, %v1070, %v929
  %v1072 = vsel %vm325, %v1071, 0
  %1074 = vmatpush.msra.mxu0 0.0
  %1075 = vmatpush.msra.mxu0 0.0
  %1076 = vmatpush.msra.mxu0 0.0
  %1077 = vmatpush.msra.mxu0 0.0
  %1078 = vmatpush.msra.mxu0 0.0
  %1079 = vmatpush.msra.mxu0 0.0
  %1080 = vmatpush.msra.mxu0 0.0
  %1081 = vmatpush.msra.mxu0 0.0
  %1082 = vmatpush.msra.mxu0 0.0
  %1083 = vmatpush.msra.mxu0 0.0
  %1084 = vmatpush.msra.mxu0 0.0
  %1085 = vmatpush.msra.mxu0 0.0
  %1086 = vmatpush.msra.mxu0 %v948
  %1087 = vmatpush.msra.mxu0 %v947
  %1088 = vmatpush.msra.mxu0 %v946
  %1089 = vmatpush.msra.mxu0 %v945
  %1090 = vmatmul.f32.gmra.mxu0 %v1072
  %v1091 = vpop.f32.mrf.mxu0
  %v1092 = vadd.f32 %v951, %v1091
  %1093 = vdwg.mxu0
  %v1094 = vmax.f32 %v1092, 0.0
  %v1096 = vsel %vm1038, %v1094, 0
  %1098 = vmatpush.msra.mxu0 0.0
  %1099 = vmatpush.msra.mxu0 0.0
  %1100 = vmatpush.msra.mxu0 0.0
  %1101 = vmatpush.msra.mxu0 0.0
  %1102 = vmatpush.msra.mxu0 0.0
  %1103 = vmatpush.msra.mxu0 0.0
  %1104 = vmatpush.msra.mxu0 0.0
  %1105 = vmatpush.msra.mxu0 0.0
  %1106 = vmatpush.msra.mxu0 %v1033
  %1107 = vmatpush.msra.mxu0 %v1032
  %1108 = vmatpush.msra.mxu0 %v1031
  %1109 = vmatpush.msra.mxu0 %v1030
  %1110 = vmatpush.msra.mxu0 %v1029
  %1111 = vmatpush.msra.mxu0 %v1028
  %1112 = vmatpush.msra.mxu0 %v1027
  %1113 = vmatpush.msra.mxu0 %v1026
  %1114 = vmatmul.f32.gmra.mxu0 %v1096
  %v1115 = vpop.f32.mrf.mxu0
  %v1116 = vadd.f32 %v1036, %v1115
  %1117 = vdwg.mxu0
  %v1118 = vlaneseq
  %v1119 = vand.u32 %v1118, 127
  %v1120 = vsub.f32 0.0, %v1063
  %v1121 = vsub.f32 0.0, %v1066
  %v1122 = vmul.f32 %v1120, 1.442695
  %v1123 = vpow.pop %v1122
  %v1124 = vmul.f32 %v1121, 1.442695
  %v1125 = vpow.pop %v1124
  %v1126 = vadd.f32 %v1123, 1.0
  %v1127 = vadd.f32 %v1125, 1.0
  %v1128 = vrcp.pop %v1126
  %v1129 = vrcp.pop %v1127
  %vm1130 = vcmp.eq.s32.totalorder %v1119, 7
  %v1131 = vsel %vm1130, %v1128, %v1063
  %v1132 = vsel %vm1130, %v1129, %v1066
  %1133 = vst.msk [vmem:[%s11] sm:$0xff] %vm75, %v1131
  %1134 = vst.msk [vmem:[%s11 + $0x8] sm:$0xff] %vm75, %v1132
  %vm1135 = vcmask 58368
  %1136 = vst.msk [vmem:[%s11 + $0x10] sm:$0x3] %vm1135, %v1116
  // Predicated region
  $region46: #{tpu_custom_call.1} parent=0 // pred_check
    _
  $region47: #{tpu_custom_call.1} parent=0 // pred_check_branch
    %1138 = sbr.rel (0) target = $region49
  $region48: #{tpu_custom_call.1} parent=0 // pred_region
    _
  $region49: #{tpu_custom_call.1} parent=0 // pred_fallthru
    _
  // Predicated region
  $region50: #{tpu_custom_call.1} parent=0 // pred_check
    _
  $region51: #{tpu_custom_call.1} parent=0 // pred_check_branch
    %1140 = sbr.rel (0) target = $region53
  $region52: #{tpu_custom_call.1} parent=0 // pred_region
    _
  $region53: #{tpu_custom_call.1} parent=0 // pred_fallthru
    _

</llo_original>
